<compile_context>
chip_gen: v6e
topology: v6e:2x2x1
jax: 0.10.0
libtpu: 0.0.40
codegen_flags: <defaults>
</compile_context>

<pallas_src>
import jax
import jax.numpy as jnp
from jax.experimental import pallas as pl
from jax.experimental.pallas import tpu as pltpu


def _normalize_kernel(x_ref, scale_ref, bias_ref, o_ref):
    # x_ref: (br, tl); scale_ref / bias_ref: (br, 1) -> lane-broadcast.
    # (x - mean) / std  ==  x * (1/std) + (-mean/std)
    o_ref[...] = x_ref[...] * scale_ref[...] + bias_ref[...]


def _round_down(v, m):
    return (v // m) * m


def normalize(x, mean, std, *,
              target_block_bytes=None,
              min_pallas_bytes=256 * 1024,
              donate_input=False):
    """Pallas TPU implementation of (x - mean[None,:,None,None]) / std[None,:,None,None]."""
    N, C, H, W = x.shape
    assert mean.shape == (C,) and std.shape == (C,)

    itemsize = jnp.dtype(x.dtype).itemsize

    # Tiny inputs: launch + per-step overhead dominates a few-KiB transfer;
    # the fused XLA broadcast op is strictly faster.
    if x.size * itemsize < min_pallas_bytes:
        return ((x - mean.reshape(1, C, 1, 1)) / std.reshape(1, C, 1, 1)).astype(x.dtype)

    R = N * C
    L = H * W

    # Fold the normalization constants: C host-side scalar divides.
    scale = (1.0 / std).astype(x.dtype)
    bias = (-mean / std).astype(x.dtype)
    scale_rows = jnp.tile(scale, N).reshape(R, 1)   # row order = n*C + c
    bias_rows = jnp.tile(bias, N).reshape(R, 1)

    x2 = x.reshape(R, L)

    # Keep the last dim lane-dense (multiple of 128) so stores are unmasked
    # full-width vst rather than masked partial stores (biggest single lever).
    Lp = int(pl.cdiv(L, 128)) * 128
    if Lp != L:
        x2 = jnp.pad(x2, ((0, 0), (0, Lp - L)))

    # ---- per-generation defaults -------------------------------------------
    try:
        phys_vmem = int(pltpu.get_tpu_info().vmem_capacity_bytes)
    except Exception:
        phys_vmem = 64 << 20  # conservative: v7x per-TensorCore VMEM
    if target_block_bytes is None:
        # Double-buffered in+out is ~4x the block; keep that well inside VMEM.
        # -> 8 MiB on 128 MiB parts (v5e/v6e), 8 MiB on v7x (64 MiB / 8).
        target_block_bytes = int(min(8 << 20, max(1 << 20, phys_vmem // 8)))

    # ---- choose the (br, tl) tile ------------------------------------------
    sub = max(8, 32 // itemsize)   # sublane granularity: 8 f32 / 16 bf16 / 32 int8
    if Lp * itemsize <= target_block_bytes:
        tl = Lp                     # whole rows fit in one block
    else:
        # Huge spatial dims: also tile along L (multiple of 128) so an 8-row
        # slab never blows past the VMEM budget.
        tl = max(128, _round_down(target_block_bytes // itemsize, 128))
        tl = min(tl, Lp)

    rows = max(1, target_block_bytes // (tl * itemsize))
    if rows >= R:
        br = R
    else:
        br = min(R, max(sub, _round_down(rows, sub)))

    # v7x megacore: a "parallel" axis only shards across the 2 TensorCores when
    # there are >= 2 grid steps; split rows if coarsening collapsed the grid.
    if pl.cdiv(R, br) * pl.cdiv(Lp, tl) < 2 and R > sub:
        br = min(br, max(sub, _round_down((R + 1) // 2, sub)))

    grid = (pl.cdiv(R, br), pl.cdiv(Lp, tl))

    # ---- VMEM budget ---------------------------------------------------------
    block_bytes = br * tl * itemsize
    working = 4 * block_bytes + 4 * (sub * 128 * itemsize)  # in+out double-buffered + slivers
    vmem_limit = int(min(max(working + (8 << 20), 32 << 20),
                         max(phys_vmem - (8 << 20), 32 << 20)))

    kwargs = {}
    if donate_input:
        # Alias x2 -> out: no separate output allocation for large activations.
        kwargs["input_output_aliases"] = {0: 0}

    out2 = pl.pallas_call(
        _normalize_kernel,
        out_shape=jax.ShapeDtypeStruct((R, Lp), x.dtype),
        grid=grid,
        in_specs=[
            pl.BlockSpec((br, tl), lambda i, j: (i, j)),   # x slab, lane-dense
            pl.BlockSpec((br, 1), lambda i, j: (i, 0)),    # per-row scale
            pl.BlockSpec((br, 1), lambda i, j: (i, 0)),    # per-row bias
        ],
        out_specs=pl.BlockSpec((br, tl), lambda i, j: (i, j)),
        compiler_params=pltpu.CompilerParams(
            dimension_semantics=("parallel", "parallel"),
            vmem_limit_bytes=vmem_limit,
        ),
        cost_estimate=pl.CostEstimate(
            flops=2 * R * L,
            transcendentals=0,
            bytes_accessed=2 * R * Lp * itemsize + 2 * R * itemsize,
        ),
        **kwargs,
    )(x2, scale_rows, bias_rows)

    if Lp != L:
        out2 = out2[:, :L]
    return out2.reshape(N, C, H, W)


if __name__ == "__main__":
    key = jax.random.PRNGKey(0)

    # CIFAR-10 normalization constants (forward hardcodes 3 channels).
    mean = jnp.array([0.4914, 0.4822, 0.4465], dtype=jnp.float32)
    std = jnp.array([0.2470, 0.2435, 0.2616], dtype=jnp.float32)

    def ref(x):
        return (x - mean.reshape(1, 3, 1, 1)) / std.reshape(1, 3, 1, 1)

    k0, k1, k2 = jax.random.split(key, 3)

    # 1) CIFAR-like input, force the Pallas path (single lane-dense block).
    x = jax.random.uniform(k0, (2, 3, 16, 16), dtype=jnp.float32)
    out = jax.block_until_ready(normalize(x, mean, std, min_pallas_bytes=0))
    assert out.shape == x.shape and out.dtype == x.dtype
    # Note: x*(1/std) + (-mean/std) differs from (x-mean)/std by ~1 ulp.
    assert jnp.allclose(out, ref(x), atol=2e-6, rtol=1e-5)

    # 2) Tiny-input bypass path (plain XLA broadcast).
    out_bypass = jax.block_until_ready(normalize(x, mean, std))
    assert jnp.allclose(out_bypass, ref(x), atol=2e-6, rtol=1e-5)

    # 3) Odd spatial size (H*W not a multiple of 128) -> padded lane-dense path.
    x_odd = jax.random.uniform(k1, (2, 3, 7, 7), dtype=jnp.float32)
    out_odd = jax.block_until_ready(normalize(x_odd, mean, std, min_pallas_bytes=0))
    assert jnp.allclose(out_odd, ref(x_odd), atol=2e-6, rtol=1e-5)

    # 4) Multi-step grid (tiny block budget forces >1 row slab / megacore split).
    x_big = jax.random.uniform(k2, (8, 3, 32, 32), dtype=jnp.float32)
    out_big = jax.block_until_ready(
        normalize(x_big, mean, std, min_pallas_bytes=0, target_block_bytes=64 * 1024))
    assert jnp.allclose(out_big, ref(x_big), atol=2e-6, rtol=1e-5)

    print("KERNEL_OK")
</pallas_src>

<mosaic_0001>
module attributes {stable_mosaic.version = 11 : i64} {
  func.func @_normalize_kernel(%arg0: i32, %arg1: i32, %arg2: memref<6x256xf32, #tpu.memory_space<vmem>>, %arg3: memref<6x1xf32, #tpu.memory_space<vmem>>, %arg4: memref<6x1xf32, #tpu.memory_space<vmem>>, %arg5: memref<6x256xf32, #tpu.memory_space<vmem>>) attributes {dimension_semantics = [#tpu.dimension_semantics<parallel>, #tpu.dimension_semantics<parallel>], iteration_bounds = array<i64: 1, 1>, scalar_prefetch = 0 : i64, scratch_operands = 0 : i64, tpu.core_type = #tpu.core_type<tc>, window_params = [{transform_indices = @transform_0, window_bounds = array<i64: 6, 256>}, {transform_indices = @transform_1, window_bounds = array<i64: 6, 1>}, {transform_indices = @transform_2, window_bounds = array<i64: 6, 1>}, {transform_indices = @transform_3, window_bounds = array<i64: 6, 256>}]} {
    %c0 = arith.constant 0 : index
    %c0_0 = arith.constant 0 : index
    %0 = vector.load %arg2[%c0, %c0_0] : memref<6x256xf32, #tpu.memory_space<vmem>>, vector<6x256xf32>
    %c0_1 = arith.constant 0 : index
    %c0_2 = arith.constant 0 : index
    %1 = vector.load %arg3[%c0_1, %c0_2] : memref<6x1xf32, #tpu.memory_space<vmem>>, vector<6x1xf32>
    %2 = vector.broadcast %1 : vector<6x1xf32> to vector<6x256xf32>
    %3 = arith.mulf %0, %2 : vector<6x256xf32>
    %c0_3 = arith.constant 0 : index
    %c0_4 = arith.constant 0 : index
    %4 = vector.load %arg4[%c0_3, %c0_4] : memref<6x1xf32, #tpu.memory_space<vmem>>, vector<6x1xf32>
    %5 = vector.broadcast %4 : vector<6x1xf32> to vector<6x256xf32>
    %6 = arith.addf %3, %5 : vector<6x256xf32>
    %c0_5 = arith.constant 0 : index
    %c0_6 = arith.constant 0 : index
    %7 = vector.load %arg5[%c0_5, %c0_6] : memref<6x256xf32, #tpu.memory_space<vmem>>, vector<6x256xf32>
    tpu.vector_store %arg5[%c0_5, %c0_6], %6 {strides = array<i32>} : memref<6x256xf32, #tpu.memory_space<vmem>>, vector<6x256xf32>,
    return
  }
  func.func @transform_0(%arg0: i32, %arg1: i32) -> (i32, i32) {
    %c0_i32 = arith.constant 0 : i32
    return %arg0, %arg1 : i32, i32
  }
  func.func @transform_1(%arg0: i32, %arg1: i32) -> (i32, i32) {
    %c0_i32 = arith.constant 0 : i32
    %c0_i32_0 = arith.constant 0 : i32
    return %arg0, %c0_i32 : i32, i32
  }
  func.func @transform_2(%arg0: i32, %arg1: i32) -> (i32, i32) {
    %c0_i32 = arith.constant 0 : i32
    %c0_i32_0 = arith.constant 0 : i32
    return %arg0, %c0_i32 : i32, i32
  }
  func.func @transform_3(%arg0: i32, %arg1: i32) -> (i32, i32) {
    %c0_i32 = arith.constant 0 : i32
    return %arg0, %arg1 : i32, i32
  }
}

</mosaic_0001>

<llo_original>
// kernel: tpu_custom_call.1
$region0: #{tpu_custom_call.1}
  #allocation0 [shape = 'u32[]', space=smem, size = 0x4, offset = 0x4, fixed_abs, tag = 'smem constant byte address 0x4 - core index']
  #allocation1 [shape = 'u32[144,128]{1,0:T(1,128)}', space=vmem, size = 0x12000, scoped, tag = 'internal scratch']
  %s0 = inlined_call_operand.vmem [shape: f32[6,256], index: 0, kind: input, shape index: {}]
  %s1 = inlined_call_operand.vmem [shape: f32[6,1], index: 1, kind: input, shape index: {}]
  %s2 = inlined_call_operand.vmem [shape: f32[6,1], index: 2, kind: input, shape index: {}]
  %s3 = inlined_call_operand.hbm [shape: f32[6,256], index: 3, kind: output, shape index: {}]
  %s4 = sld [smem:[#allocation0]]
  $region22: #{tpu_custom_call.1} parent=0
    _
  %s6 = ssub.s32 1, %s4
  %s7 = scalar_select 0, %s6, %s4
  $region1: #{tpu_custom_call.1} parent=0
    #allocation2 [shape = 'u8[8192]{0}', space=vmem, size = 0x2000, scoped, tag = 'output window, operand 0, single buffered']
    #allocation3 [shape = 's32[1]{0}', space=sflag, size = 0x4, scoped, tag = 'scoped memory for tpu_custom_call.1']
    %8 = vsyncpa [#allocation3], 0
    // Predicated region
    $region2: #{tpu_custom_call.1} parent=1 // pred_check
      _
    $region3: #{tpu_custom_call.1} parent=1 // pred_check_branch
      %10 = sbr.rel (0) target = $region5
    $region4: #{tpu_custom_call.1} parent=1 // pred_region
      _
    $region5: #{tpu_custom_call.1} parent=1 // pred_fallthru
      _
    // Predicated region
    $region6: #{tpu_custom_call.1} parent=1 // pred_check
      _
    $region7: #{tpu_custom_call.1} parent=1 // pred_check_branch
      %12 = sbr.rel (0) target = $region9
    $region8: #{tpu_custom_call.1} parent=1 // pred_region
      _
    $region9: #{tpu_custom_call.1} parent=1 // pred_fallthru
      _
    // Predicated region
    $region10: #{tpu_custom_call.1} parent=1 // pred_check
      _
    $region11: #{tpu_custom_call.1} parent=1 // pred_check_branch
      %14 = sbr.rel (0) target = $region13
    $region12: #{tpu_custom_call.1} parent=1 // pred_region
      _
    $region13: #{tpu_custom_call.1} parent=1 // pred_fallthru
      _
    %v15 = vld [vmem:[%s0] sm:$0x3f]
    %v16 = vld [vmem:[%s0 + $0x8] sm:$0x3f]
    %v17 = vld [vmem:[%s1] sm:$0x3f]
    %19 = vset.pattern.permute.xlu0 0
    %20 = vperm.xlu0 %19, %v17
    %v21 = vpop.permute.xlu0 %20
    %v23 = vmul.f32 %v15, %v21
    %v24 = vmul.f32 %v16, %v21
    %v25 = vld [vmem:[%s2] sm:$0x3f]
    %27 = vset.pattern.permute.xlu0 0
    %28 = vperm.xlu0 %27, %v25
    %v29 = vpop.permute.xlu0 %28
    %v31 = vadd.f32 %v23, %v29
    %v32 = vadd.f32 %v24, %v29
    %33 = vst [vmem:[#allocation2] sm:$0x3f] %v31
    %34 = vst [vmem:[#allocation2 + $0x8] sm:$0x3f] %v32
    // Predicated region
    $region14: #{tpu_custom_call.1} parent=1 // pred_check
      _
    $region15: #{tpu_custom_call.1} parent=1 // pred_check_branch
      %36 = sbr.rel (0) target = $region17
    $region16: #{tpu_custom_call.1} parent=1 // pred_region
      %s38 = ssub.s32 256, 256
      %39 = vsyncadd [#allocation3], %s38
      %s41 = sshll.u32 [#allocation2], 4
      %s42 = int_to_ptr.vmem [resolvable:$true] %s41
      %44 = dma.vmem_to_hbm [thread:$0]  %s42, 256, %s3, [#allocation3]
    $region17: #{tpu_custom_call.1} parent=1 // pred_fallthru
      _
    // Predicated region
    $region18: #{tpu_custom_call.1} parent=1 // pred_check
      _
    $region19: #{tpu_custom_call.1} parent=1 // pred_check_branch
      %46 = sbr.rel (0) target = $region21
    $region20: #{tpu_custom_call.1} parent=1 // pred_region
      %47 = dma.done [#allocation3], 256
    $region21: #{tpu_custom_call.1} parent=1 // pred_fallthru
      _
    %48 = vsyncpa [#allocation3], 1

</llo_original>
